<compile_context>
chip_gen: v7x
topology: tpu7x:2x2x1
jax: 0.10.0
libtpu: 0.0.40
codegen_flags: <defaults>
</compile_context>

<pallas_src>
import math

import jax
import jax.numpy as jnp
from jax.experimental import pallas as pl
from jax.experimental.pallas import tpu as pltpu


# ---------------------------------------------------------------------------
# Buffer setup — plain JAX glue, matches the PyTorch __init__.
# ---------------------------------------------------------------------------
def make_positional_encoding(d_model: int, max_len: int = 1000) -> jnp.ndarray:
    """Build the sinusoidal pe buffer of shape (max_len, 1, d_model)."""
    if d_model % 2 != 0:
        # The PyTorch reference also fails for odd d_model; fail loudly.
        raise ValueError("d_model must be even")
    position = jnp.arange(max_len, dtype=jnp.float32)[:, None]            # (max_len, 1)
    div_term = jnp.exp(
        jnp.arange(0, d_model, 2, dtype=jnp.float32)
        * (-math.log(10000.0) / d_model)
    )                                                                      # (d_model//2,)
    angles = position * div_term                                           # (max_len, d_model//2)
    pe = jnp.zeros((max_len, d_model), dtype=jnp.float32)
    pe = pe.at[:, 0::2].set(jnp.sin(angles))
    pe = pe.at[:, 1::2].set(jnp.cos(angles))
    return pe[:, None, :]                                                  # (max_len, 1, d_model)


# ---------------------------------------------------------------------------
# Kernel: out = x + pe (pe either same-shaped 2-D tile, or broadcast over batch)
# ---------------------------------------------------------------------------
def _pos_enc_kernel(x_ref, pe_ref, o_ref):
    x = x_ref[...]
    pe = pe_ref[...]
    if pe.ndim == x.ndim - 1:
        # x: (TS, B, D), pe: (TS, D) -> broadcast over the batch (sublane) axis.
        pe = pe[:, None, :]
    o_ref[...] = (x + pe).astype(o_ref.dtype)


# ---------------------------------------------------------------------------
# Sizing helpers (generation-aware, with safe fallbacks)
# ---------------------------------------------------------------------------
def _vmem_budget_bytes() -> int:
    """~75% of physical VMEM; fallback is safe on every generation (v7x 64 MiB)."""
    try:
        cap = int(pltpu.get_tpu_info().vmem_capacity_bytes)
    except Exception:
        cap = 64 << 20
    return (cap * 3) // 4


def _grid_semantics():
    """CORE_PARALLEL only on v7x (2 TensorCores); plain 'parallel' elsewhere."""
    try:
        kind = jax.devices()[0].device_kind.lower()
        if "v7" in kind:
            return (pltpu.CORE_PARALLEL,)
    except Exception:
        pass
    return ("parallel",)


def _choose_tile_rows(seq_len: int, row_bytes: int,
                      target_tile_bytes: int, min_steps: int = 8) -> int:
    """Tile bytes <= target (ceiling), >= min_steps grid steps when possible,
    tile_rows a multiple of 8 (or the full sequence)."""
    rows_cap = max(1, target_tile_bytes // max(1, row_bytes))
    rows = min(rows_cap, max(8, pl.cdiv(seq_len, min_steps)))
    if rows >= seq_len:
        return int(seq_len)
    rows = max(8, (rows // 8) * 8)          # sublane-slab alignment
    if rows >= seq_len:
        return int(seq_len)
    return int(rows)


# ---------------------------------------------------------------------------
# Forward wrapper
# ---------------------------------------------------------------------------
def positional_encoding_forward(
    x: jnp.ndarray,
    pe: jnp.ndarray,
    *,
    promote_like_torch: bool = True,
    donate_x: bool = False,
) -> jnp.ndarray:
    """x: (seq, batch, d_model); pe: (max_len, 1, d_model) -> x + pe[:seq]."""
    S, B, D = x.shape
    if pe.ndim != 3 or pe.shape[1] != 1 or pe.shape[2] != D:
        raise ValueError("pe must have shape (max_len, 1, d_model) matching x")
    if S > pe.shape[0]:
        raise ValueError("sequence length exceeds max_len of the pe buffer")

    out_dtype = jnp.result_type(x.dtype, pe.dtype) if promote_like_torch else x.dtype
    pe2d = pe[:S, 0, :]                              # squeeze to dense 2-D (S, D)
    if not promote_like_torch:
        pe2d = pe2d.astype(x.dtype)

    vmem_limit = _vmem_budget_bytes()                # ~48 MiB v7x, ~96 MiB v5e/v6e
    target_tile_bytes = int(min(16 << 20, max(4 << 20, vmem_limit // 6)))
    itemsize = max(jnp.dtype(x.dtype).itemsize, jnp.dtype(out_dtype).itemsize)

    # Lane-dense flattening when (batch, d_model) blocks would be sparse.
    flatten = (B < 8) or (D < 128)

    if flatten:
        C = B * D
        x_in = x.reshape(S, C)                       # contiguous view
        pe_in = jnp.tile(pe2d, (1, B))               # (S, C): pe_in[s, b*D+d] = pe[s, d]
        tile_rows = _choose_tile_rows(S, C * itemsize, target_tile_bytes)
        grid = int(pl.cdiv(S, tile_rows))
        in_specs = [
            pl.BlockSpec((tile_rows, C), lambda s: (s, 0)),
            pl.BlockSpec((tile_rows, C), lambda s: (s, 0)),
        ]
        out_specs = pl.BlockSpec((tile_rows, C), lambda s: (s, 0))
        out_shape = jax.ShapeDtypeStruct((S, C), out_dtype)
    else:
        x_in = x
        pe_in = pe2d                                 # (S, D), broadcast in-kernel
        tile_rows = _choose_tile_rows(S, B * D * itemsize, target_tile_bytes)
        grid = int(pl.cdiv(S, tile_rows))
        in_specs = [
            pl.BlockSpec((tile_rows, B, D), lambda s: (s, 0, 0)),
            pl.BlockSpec((tile_rows, D), lambda s: (s, 0)),
        ]
        out_specs = pl.BlockSpec((tile_rows, B, D), lambda s: (s, 0, 0))
        out_shape = jax.ShapeDtypeStruct((S, B, D), out_dtype)

    aliases = {0: 0} if (donate_x and out_dtype == x.dtype) else {}

    out = pl.pallas_call(
        _pos_enc_kernel,
        out_shape=out_shape,
        grid_spec=pltpu.PrefetchScalarGridSpec(
            num_scalar_prefetch=0,
            grid=(grid,),
            in_specs=in_specs,
            out_specs=out_specs,
        ),
        compiler_params=pltpu.CompilerParams(
            dimension_semantics=_grid_semantics(),
            vmem_limit_bytes=vmem_limit,
        ),
        input_output_aliases=aliases,
    )(x_in, pe_in)

    return out.reshape(S, B, D) if flatten else out


# ---------------------------------------------------------------------------
# Reference (pure JAX) for sanity check
# ---------------------------------------------------------------------------
def positional_encoding_ref(x: jnp.ndarray, pe: jnp.ndarray) -> jnp.ndarray:
    return x + pe[: x.shape[0]]


if __name__ == "__main__":
    max_len = 1000
    key = jax.random.PRNGKey(0)

    # Small shapes consistent with the module:
    #   (8, 2, 32)   : flattened lane-dense path, single tile
    #   (9, 2, 32)   : flattened path with a partial final tile
    #   (32, 8, 128) : 3-D broadcast path (B >= 8, D >= 128), multi-step grid
    cases = [(8, 2, 32), (9, 2, 32), (32, 8, 128)]
    for seq_len, batch, d_model in cases:
        pe = make_positional_encoding(d_model, max_len)
        key, sub = jax.random.split(key)
        x = jax.random.normal(sub, (seq_len, batch, d_model), dtype=jnp.float32)

        ref = positional_encoding_ref(x, pe)          # computed before the kernel call
        out = jax.block_until_ready(positional_encoding_forward(x, pe))

        assert out.shape == (seq_len, batch, d_model)
        assert out.dtype == ref.dtype
        assert jnp.allclose(out, ref, atol=1e-6, rtol=1e-6), (
            f"mismatch vs reference for shape {(seq_len, batch, d_model)}"
        )

    print("KERNEL_OK")
</pallas_src>

<mosaic_0001>
module attributes {stable_mosaic.version = 11 : i64} {
  func.func @_pos_enc_kernel(%arg0: i32, %arg1: memref<8x64xf32, #tpu.memory_space<vmem>>, %arg2: memref<8x64xf32, #tpu.memory_space<vmem>>, %arg3: memref<8x64xf32, #tpu.memory_space<vmem>>) attributes {dimension_semantics = [#tpu.dimension_semantics<parallel>], iteration_bounds = array<i64: 1>, scalar_prefetch = 0 : i64, scratch_operands = 0 : i64, tpu.core_type = #tpu.core_type<tc>, window_params = [{transform_indices = @transform_0, window_bounds = array<i64: 8, 64>}, {transform_indices = @transform_1, window_bounds = array<i64: 8, 64>}, {transform_indices = @transform_2, window_bounds = array<i64: 8, 64>}]} {
    %c0 = arith.constant 0 : index
    %c0_0 = arith.constant 0 : index
    %0 = vector.load %arg1[%c0, %c0_0] : memref<8x64xf32, #tpu.memory_space<vmem>>, vector<8x64xf32>
    %c0_1 = arith.constant 0 : index
    %c0_2 = arith.constant 0 : index
    %1 = vector.load %arg2[%c0_1, %c0_2] : memref<8x64xf32, #tpu.memory_space<vmem>>, vector<8x64xf32>
    %2 = arith.addf %0, %1 : vector<8x64xf32>
    %c0_3 = arith.constant 0 : index
    %c0_4 = arith.constant 0 : index
    %3 = vector.load %arg3[%c0_3, %c0_4] : memref<8x64xf32, #tpu.memory_space<vmem>>, vector<8x64xf32>
    tpu.vector_store %arg3[%c0_3, %c0_4], %2 {strides = array<i32>} : memref<8x64xf32, #tpu.memory_space<vmem>>, vector<8x64xf32>,
    return
  }
  func.func @transform_0(%arg0: i32) -> (i32, i32) {
    %c0_i32 = arith.constant 0 : i32
    %c0_i32_0 = arith.constant 0 : i32
    return %arg0, %c0_i32 : i32, i32
  }
  func.func @transform_1(%arg0: i32) -> (i32, i32) {
    %c0_i32 = arith.constant 0 : i32
    %c0_i32_0 = arith.constant 0 : i32
    return %arg0, %c0_i32 : i32, i32
  }
  func.func @transform_2(%arg0: i32) -> (i32, i32) {
    %c0_i32 = arith.constant 0 : i32
    %c0_i32_0 = arith.constant 0 : i32
    return %arg0, %c0_i32 : i32, i32
  }
}

</mosaic_0001>

<llo_original>
// kernel: tpu_custom_call.1
$region0: #{tpu_custom_call.1}
  #allocation0 [shape = 'u32[]', space=smem, size = 0x4, offset = 0x4, fixed_abs, tag = 'smem constant byte address 0x4 - core index']
  #allocation1 [shape = 'u32[144,128]{1,0:T(1,128)}', space=vmem, size = 0x12000, scoped, tag = 'internal scratch']
  %s0 = inlined_call_operand.hbm [shape: f32[8,64], index: 0, kind: input, shape index: {}]
  %s1 = inlined_call_operand.hbm [shape: f32[8,64], index: 1, kind: input, shape index: {}]
  %s2 = inlined_call_operand.hbm [shape: f32[8,64], index: 2, kind: output, shape index: {}]
  %s3 = sld [smem:[#allocation0]]
  $region26: #{tpu_custom_call.1} parent=0
    _
  %s5 = ssub.s32 1, %s3
  %s6 = scalar_select 0, %s5, %s3
  $region1: #{tpu_custom_call.1} parent=0
    #allocation2 [shape = 'u8[4096]{0}', space=vmem, size = 0x1000, scoped, tag = 'input window, operand 0, single buffered']
    #allocation3 [shape = 's32[1]{0}', space=sflag, size = 0x4, scoped, tag = 'scoped memory for tpu_custom_call.1']
    #allocation4 [shape = 's32[1]{0}', space=sflag, size = 0x4, scoped, tag = 'scoped memory for tpu_custom_call.1']
    #allocation5 [shape = 'u8[4096]{0}', space=vmem, size = 0x1000, scoped, tag = 'input window, operand 1, single buffered']
    #allocation6 [shape = 's32[1]{0}', space=sflag, size = 0x4, scoped, tag = 'scoped memory for tpu_custom_call.1']
    #allocation7 [shape = 'u8[4096]{0}', space=vmem, size = 0x1000, scoped, tag = 'output window, operand 0, single buffered']
    %7 = vsyncpa [#allocation3], 0
    %8 = vsyncpa [#allocation6], 0
    %9 = vsyncpa [#allocation4], 0
    // Predicated region
    $region2: #{tpu_custom_call.1} parent=1 // pred_check
      _
    $region3: #{tpu_custom_call.1} parent=1 // pred_check_branch
      %11 = sbr.rel (0) target = $region5
    $region4: #{tpu_custom_call.1} parent=1 // pred_region
      %s13 = ssub.s32 128, 128
      %14 = vsyncadd [#allocation3], %s13
      %s16 = sshll.u32 [#allocation2], 4
      %s17 = int_to_ptr.vmem [resolvable:$true] %s16
      %19 = dma.hbm_to_vmem [thread:$0]  %s0, 128, %s17, [#allocation3]
    $region5: #{tpu_custom_call.1} parent=1 // pred_fallthru
      _
    // Predicated region
    $region6: #{tpu_custom_call.1} parent=1 // pred_check
      _
    $region7: #{tpu_custom_call.1} parent=1 // pred_check_branch
      %21 = sbr.rel (0) target = $region9
    $region8: #{tpu_custom_call.1} parent=1 // pred_region
      %s23 = ssub.s32 128, 128
      %24 = vsyncadd [#allocation6], %s23
      %s26 = sshll.u32 [#allocation5], 4
      %s27 = int_to_ptr.vmem [resolvable:$true] %s26
      %29 = dma.hbm_to_vmem [thread:$0]  %s1, 128, %s27, [#allocation6]
    $region9: #{tpu_custom_call.1} parent=1 // pred_fallthru
      _
    // Predicated region
    $region10: #{tpu_custom_call.1} parent=1 // pred_check
      _
    $region11: #{tpu_custom_call.1} parent=1 // pred_check_branch
      %31 = sbr.rel (0) target = $region13
    $region12: #{tpu_custom_call.1} parent=1 // pred_region
      %32 = dma.done [#allocation3], 128
    $region13: #{tpu_custom_call.1} parent=1 // pred_fallthru
      _
    // Predicated region
    $region14: #{tpu_custom_call.1} parent=1 // pred_check
      _
    $region15: #{tpu_custom_call.1} parent=1 // pred_check_branch
      %34 = sbr.rel (0) target = $region17
    $region16: #{tpu_custom_call.1} parent=1 // pred_region
      %35 = dma.done [#allocation6], 128
    $region17: #{tpu_custom_call.1} parent=1 // pred_fallthru
      _
    %v36 = vld [vmem:[#allocation2] sm:$0xff]
    %v37 = vld [vmem:[#allocation5] sm:$0xff]
    %v38 = vadd.f32 %v36, %v37
    %vm39 = vcmask 523264
    %40 = vst.msk [vmem:[#allocation7] sm:$0xff] %vm39, %v38
    // Predicated region
    $region18: #{tpu_custom_call.1} parent=1 // pred_check
      _
    $region19: #{tpu_custom_call.1} parent=1 // pred_check_branch
      %42 = sbr.rel (0) target = $region21
    $region20: #{tpu_custom_call.1} parent=1 // pred_region
      %s44 = ssub.s32 128, 128
      %45 = vsyncadd [#allocation4], %s44
      %s47 = sshll.u32 [#allocation7], 4
      %s48 = int_to_ptr.vmem [resolvable:$true] %s47
      %50 = dma.vmem_to_hbm [thread:$0]  %s48, 128, %s2, [#allocation4]
    $region21: #{tpu_custom_call.1} parent=1 // pred_fallthru
      _
    // Predicated region
    $region22: #{tpu_custom_call.1} parent=1 // pred_check
      _
    $region23: #{tpu_custom_call.1} parent=1 // pred_check_branch
      %52 = sbr.rel (0) target = $region25
    $region24: #{tpu_custom_call.1} parent=1 // pred_region
      %53 = dma.done [#allocation4], 128
    $region25: #{tpu_custom_call.1} parent=1 // pred_fallthru
      _
    %54 = vsyncpa [#allocation3], 1
    %55 = vsyncpa [#allocation6], 1
    %56 = vsyncpa [#allocation4], 1

</llo_original>
